<compile_context>
chip_gen: v7x
topology: tpu7x:2x2x1
jax: 0.10.0
libtpu: 0.0.40
codegen_flags: <defaults>
</compile_context>

<pallas_src>
import functools

import jax
import jax.numpy as jnp
import numpy as np
from jax.experimental import pallas as pl
from jax.experimental.pallas import tpu as pltpu


def _round_up(x, m):
    return ((x + m - 1) // m) * m


def _choose_tile(n, d_pad):
    """Pick the row/col tile and scoped-VMEM budget for this chip / problem."""
    try:
        info = pltpu.get_tpu_info()
        vmem_phys = int(getattr(info, "vmem_capacity_bytes", 64 * 1024 * 1024))
    except Exception:  # no device / older runtime: assume the smallest (v7x)
        vmem_phys = 64 * 1024 * 1024
    big_vmem = vmem_phys >= 100 * 1024 * 1024          # v5e / v6e (128 MiB)
    budget = (60 if big_vmem else 26) * 1024 * 1024    # leave pipeline headroom

    if n <= 512:
        t = 128
    elif n <= 4096 or not big_vmem:
        t = 256
    else:
        t = 512

    # Footprint guard: 2 double-buffered input tiles (full D) + ~10 live
    # (t, t) f32 elementwise temporaries.  Shrink t rather than OOM.
    while t > 128:
        footprint = 2 * 2 * t * d_pad * 4 + 10 * t * t * 4
        if footprint <= budget:
            break
        t //= 2
    # TODO(synk): tile the contraction (D) axis for very wide latents
    # (d_pad > ~12k on v7x) instead of only shrinking t.

    if big_vmem and t >= 512:
        vmem_limit = 80 * 1024 * 1024
    elif big_vmem and t >= 256:
        vmem_limit = 64 * 1024 * 1024
    else:
        vmem_limit = 32 * 1024 * 1024
    return t, vmem_limit


def _rbf_sum(l2, neg_inv_bw, multipliers):
    """sum_m exp(-l2 / (bw * m)), with neg_inv_bw = -1/bw (scalar), l2 >= 0."""
    m_max = max(multipliers)
    exps = [m_max / m for m in multipliers]

    def _is_pow2_int(e):
        r = int(round(e))
        return r >= 1 and abs(e - r) < 1e-9 and (r & (r - 1)) == 0 and r <= (1 << 20)

    if all(_is_pow2_int(e) for e in exps):
        # Fast path: ONE EUP exp; every other kernel is a VPU squaring of it.
        # Accumulation is interleaved with squaring to keep live ranges short.
        targets = sorted({int(round(e)) for e in exps})
        t = jnp.exp(l2 * (neg_inv_bw * (1.0 / m_max)))
        acc = None
        cur, p = t, 1
        while True:
            if p in targets:
                acc = cur if acc is None else acc + cur
            if p >= targets[-1]:
                break
            cur = cur * cur
            p *= 2
        return acc

    # Generic fallback: one exp per multiplier, scalar rate hoisted
    # (no per-element vector divides).
    acc = None
    for m in multipliers:
        term = jnp.exp(l2 * (neg_inv_bw * (1.0 / m)))
        acc = term if acc is None else acc + term
    return acc


def _mmd_tile_kernel(il_ref, jl_ref, nbw_ref, zi_ref, zjt_ref, out_ref, *,
                     tm, tn, n_x, n_total, multipliers, use_bf16):
    t = pl.program_id(0)
    i = il_ref[t]                                      # row-tile index (SMEM)
    j = jl_ref[t]                                      # col-tile index (SMEM)

    zi = zi_ref[...]                                   # (tm, Dp) f32
    zjt = zjt_ref[...]                                 # (Dp, tn) f32 (pre-transposed)

    sq_i = jnp.sum(zi * zi, axis=-1, keepdims=True)    # (tm, 1)
    sq_j = jnp.sum(zjt * zjt, axis=0, keepdims=True)   # (1, tn) -- no relayout

    if use_bf16:
        gram = jnp.dot(zi.astype(jnp.bfloat16), zjt.astype(jnp.bfloat16),
                       preferred_element_type=jnp.float32)      # MXU-native
    else:
        gram = jnp.dot(zi, zjt, preferred_element_type=jnp.float32)

    l2 = jnp.maximum(sq_i + sq_j - 2.0 * gram, 0.0)    # (tm, tn)

    neg_inv_bw = nbw_ref[0]                            # -1/bandwidth (SMEM)
    k = _rbf_sum(l2, neg_inv_bw, multipliers)          # (tm, tn)

    # Weighted reduction == XX_mean - 2*XY_mean + YY_mean; weights are 0 on
    # zero-padded rows/cols so padding never contributes.
    row_ids = i * tm + jax.lax.broadcasted_iota(jnp.int32, (tm, 1), 0)
    col_ids = j * tn + jax.lax.broadcasted_iota(jnp.int32, (1, tn), 1)
    inv_nx = 1.0 / max(n_x, 1)
    neg_inv_ny = -1.0 / max(n_total - n_x, 1)
    w_row = jnp.where(row_ids < n_x, inv_nx,
                      jnp.where(row_ids < n_total, neg_inv_ny, 0.0)
                      ).astype(jnp.float32)
    w_col = jnp.where(col_ids < n_x, inv_nx,
                      jnp.where(col_ids < n_total, neg_inv_ny, 0.0)
                      ).astype(jnp.float32)

    # Rank-1 factored reduction: one fewer full (tm, tn) VPU multiply.
    col_part = jnp.sum(k * w_col, axis=-1, keepdims=True)   # (tm, 1)
    tile_sum = jnp.sum(col_part * w_row)                     # scalar

    factor = jnp.where(j > i, 2.0, 1.0)                # mirror tile (K symmetric)
    out_ref[...] = jnp.full(out_ref.shape, factor * tile_sum,
                            dtype=out_ref.dtype)


def mmd_loss(x, y, n_kernels=5, mul_factor=2.0, bandwidth=None):
    """MMDLoss.forward(X, Y) with RBF(n_kernels, mul_factor, bandwidth)."""
    x = jnp.asarray(x, jnp.float32)
    y = jnp.asarray(y, jnp.float32)
    n_x, d = x.shape
    n_y = y.shape[0]
    n = n_x + n_y

    multipliers = tuple(float(mul_factor) ** (k - n_kernels // 2)
                        for k in range(n_kernels))

    d_pad = _round_up(max(d, 1), 128)
    t_rows, vmem_limit = _choose_tile(n, d_pad)
    n_pad = _round_up(max(n, 1), t_rows)
    num_i = n_pad // t_rows

    # Flattened upper-triangular tile list (scalar-prefetch -> SMEM).
    ii, jj = np.triu_indices(num_i)
    num_tiles = int(ii.shape[0])
    i_list = jnp.asarray(ii, jnp.int32)
    j_list = jnp.asarray(jj, jnp.int32)

    # Padded joint matrix Z = [X; Y] and its one-time transpose Z^T so the
    # in-kernel gram matmul is (tm,K)x(K,tn) with no per-tile RHS transpose.
    z = jnp.zeros((n_pad, d_pad), jnp.float32)
    z = z.at[:n_x, :d].set(x)
    z = z.at[n_x:n, :d].set(y)
    zt = z.T

    # Bandwidth = sum of pairwise squared distances / (n^2 - n), computed
    # analytically in O(N*D):  sum_ij ||zi-zj||^2 = 2n*sum_i||zi||^2 - 2||sum_i zi||^2.
    if bandwidth is None:
        s = jnp.sum(z * z)
        mvec = jnp.sum(z, axis=0)
        l2_sum = 2.0 * n * s - 2.0 * jnp.dot(mvec, mvec)
        denom = float(max(n * n - n, 1))               # guard degenerate n == 1
        bw = l2_sum / denom
    else:
        bw = jnp.asarray(bandwidth, jnp.float32)
    neg_inv_bw = (-1.0 / bw).astype(jnp.float32).reshape(1)

    use_bf16 = d_pad >= 512      # small D is EUP/VPU bound -> keep f32 precision

    kernel = functools.partial(
        _mmd_tile_kernel, tm=t_rows, tn=t_rows, n_x=n_x, n_total=n,
        multipliers=multipliers, use_bf16=use_bf16)

    cost = pl.CostEstimate(
        flops=int(num_tiles * (2 * t_rows * t_rows * d_pad
                               + 12 * t_rows * t_rows)),
        transcendentals=int(num_tiles * t_rows * t_rows),
        bytes_accessed=int(num_tiles * (2 * t_rows * d_pad * 4 + 8 * 128 * 4)
                           + 2 * n_pad * d_pad * 4),
    )

    grid_spec = pltpu.PrefetchScalarGridSpec(
        num_scalar_prefetch=2,                         # i_list, j_list
        grid=(num_tiles,),
        in_specs=[
            pl.BlockSpec(memory_space=pltpu.SMEM),                     # -1/bw
            pl.BlockSpec((t_rows, d_pad), lambda t, il, jl: (il[t], 0)),  # Z rows
            pl.BlockSpec((d_pad, t_rows), lambda t, il, jl: (0, jl[t])),  # Z^T cols
        ],
        out_specs=pl.BlockSpec((1, 8, 128), lambda t, il, jl: (t, 0, 0)),
    )

    out = pl.pallas_call(
        kernel,
        out_shape=jax.ShapeDtypeStruct((num_tiles, 8, 128), jnp.float32),
        grid_spec=grid_spec,
        compiler_params=pltpu.CompilerParams(
            dimension_semantics=("parallel",),         # even split across TCs
            vmem_limit_bytes=vmem_limit,
        ),
        cost_estimate=cost,
    )(i_list, j_list, neg_inv_bw, z, zt)

    # Each tile wrote its (already-doubled) partial sum into its own block.
    return jnp.sum(out[:, 0, 0])


def _mmd_reference(x, y, n_kernels=5, mul_factor=2.0):
    """Pure-JAX reference mirroring the PyTorch module, for a sanity check."""
    z = jnp.concatenate([x, y], axis=0).astype(jnp.float32)
    n = z.shape[0]
    diff = z[:, None, :] - z[None, :, :]
    l2 = jnp.sum(diff * diff, axis=-1)
    bw = jnp.sum(l2) / (n * n - n)
    mults = jnp.asarray(mul_factor ** (np.arange(n_kernels) - n_kernels // 2),
                        jnp.float32)
    k = jnp.exp(-l2[None, ...] / (bw * mults)[:, None, None]).sum(axis=0)
    n_x = x.shape[0]
    xx = k[:n_x, :n_x].mean()
    xy = k[:n_x, n_x:].mean()
    yy = k[n_x:, n_x:].mean()
    return xx - 2.0 * xy + yy


if __name__ == "__main__":
    key = jax.random.PRNGKey(0)
    kx, ky, k2x, k2y = jax.random.split(key, 4)

    # Module-consistent small shapes: two batches of 8 samples, 32 latent dims.
    X = jax.random.normal(kx, (8, 32), dtype=jnp.float32)
    Y = jax.random.normal(ky, (8, 32), dtype=jnp.float32) + 0.5
    result = jax.block_until_ready(mmd_loss(X, Y))
    ref = _mmd_reference(X, Y)
    assert jnp.allclose(result, ref, rtol=1e-3, atol=1e-5), (result, ref)

    # Non-aligned, multi-tile case: exercises padding, the flattened
    # triangular grid (6 tiles), and the off-diagonal doubling.
    X2 = jax.random.normal(k2x, (150, 16), dtype=jnp.float32) * 1.3
    Y2 = jax.random.normal(k2y, (170, 16), dtype=jnp.float32) + 0.25
    result2 = jax.block_until_ready(mmd_loss(X2, Y2))
    ref2 = _mmd_reference(X2, Y2)
    assert jnp.allclose(result2, ref2, rtol=1e-3, atol=2e-5), (result2, ref2)

    print("KERNEL_OK")
</pallas_src>

<mosaic_0001>
module attributes {stable_mosaic.version = 11 : i64} {
  func.func @_mmd_tile_kernel(%arg0: i32, %arg1: memref<1xi32, #tpu.memory_space<smem>>, %arg2: memref<1xi32, #tpu.memory_space<smem>>, %arg3: memref<1xf32, #tpu.memory_space<smem>>, %arg4: memref<128x128xf32, #tpu.memory_space<vmem>>, %arg5: memref<128x128xf32, #tpu.memory_space<vmem>>, %arg6: memref<1x8x128xf32, #tpu.memory_space<vmem>>) attributes {dimension_semantics = [#tpu.dimension_semantics<parallel>], iteration_bounds = array<i64: 1>, scalar_prefetch = 2 : i64, scratch_operands = 0 : i64, tpu.core_type = #tpu.core_type<tc>, window_params = [{transform_indices = @transform_0, window_bounds = array<i64: 1>}, {transform_indices = @transform_1, window_bounds = array<i64: 128, 128>}, {transform_indices = @transform_2, window_bounds = array<i64: 128, 128>}, {transform_indices = @transform_3, window_bounds = array<i64: 1, 8, 128>}]} {
    %0 = arith.index_cast %arg0 : i32 to index
    %1 = memref.load %arg1[%0] : memref<1xi32, #tpu.memory_space<smem>>
    %2 = arith.index_cast %arg0 : i32 to index
    %3 = memref.load %arg2[%2] : memref<1xi32, #tpu.memory_space<smem>>
    %c0 = arith.constant 0 : index
    %c0_0 = arith.constant 0 : index
    %4 = vector.load %arg4[%c0, %c0_0] : memref<128x128xf32, #tpu.memory_space<vmem>>, vector<128x128xf32>
    %c0_1 = arith.constant 0 : index
    %c0_2 = arith.constant 0 : index
    %5 = vector.load %arg5[%c0_1, %c0_2] : memref<128x128xf32, #tpu.memory_space<vmem>>, vector<128x128xf32>
    %6 = arith.mulf %4, %4 : vector<128x128xf32>
    %cst = arith.constant dense<0.000000e+00> : vector<128xf32>
    %7 = vector.multi_reduction <add>, %6, %cst [1] : vector<128x128xf32> to vector<128xf32>
    %8 = vector.shape_cast %7 : vector<128xf32> to vector<128x1xf32>
    %9 = arith.mulf %5, %5 : vector<128x128xf32>
    %cst_3 = arith.constant dense<0.000000e+00> : vector<128xf32>
    %10 = vector.multi_reduction <add>, %9, %cst_3 [0] : vector<128x128xf32> to vector<128xf32>
    %11 = vector.shape_cast %10 : vector<128xf32> to vector<1x128xf32>
    %cst_4 = arith.constant dense<0.000000e+00> : vector<128x128xf32>
    %12 = tpu.matmul %4, %5, %cst_4 {dimension_numbers = #tpu.dot_dimension_numbers<[1], [0], [0], [1], [0, 0, 1, 1], [], []>} : vector<128x128xf32>, vector<128x128xf32>, vector<128x128xf32> -> vector<128x128xf32>
    %13 = vector.broadcast %8 : vector<128x1xf32> to vector<128x128xf32>
    %14 = vector.broadcast %11 : vector<1x128xf32> to vector<128x128xf32>
    %15 = arith.addf %13, %14 : vector<128x128xf32>
    %cst_5 = arith.constant 2.000000e+00 : f32
    %16 = vector.broadcast %cst_5 : f32 to vector<128x128xf32>
    %17 = arith.mulf %16, %12 : vector<128x128xf32>
    %18 = arith.subf %15, %17 : vector<128x128xf32>
    %cst_6 = arith.constant 0.000000e+00 : f32
    %19 = vector.broadcast %cst_6 : f32 to vector<128x128xf32>
    %20 = arith.maximumf %18, %19 : vector<128x128xf32>
    %c0_7 = arith.constant 0 : index
    %21 = memref.load %arg3[%c0_7] : memref<1xf32, #tpu.memory_space<smem>>
    %cst_8 = arith.constant 2.500000e-01 : f32
    %22 = arith.mulf %21, %cst_8 : f32
    %23 = vector.broadcast %22 : f32 to vector<128x128xf32>
    %24 = arith.mulf %20, %23 : vector<128x128xf32>
    %25 = math.exp %24 : vector<128x128xf32>
    %26 = arith.mulf %25, %25 : vector<128x128xf32>
    %27 = arith.addf %25, %26 : vector<128x128xf32>
    %28 = arith.mulf %26, %26 : vector<128x128xf32>
    %29 = arith.addf %27, %28 : vector<128x128xf32>
    %30 = arith.mulf %28, %28 : vector<128x128xf32>
    %31 = arith.addf %29, %30 : vector<128x128xf32>
    %32 = arith.mulf %30, %30 : vector<128x128xf32>
    %33 = arith.addf %31, %32 : vector<128x128xf32>
    %c128_i32 = arith.constant 128 : i32
    %34 = arith.muli %1, %c128_i32 : i32
    %35 = tpu.iota {dimensions = array<i32: 0>} : vector<128x1xi32>
    %36 = vector.broadcast %34 : i32 to vector<128x1xi32>
    %37 = arith.addi %36, %35 : vector<128x1xi32>
    %c128_i32_9 = arith.constant 128 : i32
    %38 = arith.muli %3, %c128_i32_9 : i32
    %39 = tpu.iota {dimensions = array<i32: 1>} : vector<1x128xi32>
    %40 = vector.broadcast %38 : i32 to vector<1x128xi32>
    %41 = arith.addi %40, %39 : vector<1x128xi32>
    %c8_i32 = arith.constant 8 : i32
    %42 = vector.broadcast %c8_i32 : i32 to vector<128x1xi32>
    %43 = arith.cmpi slt, %37, %42 : vector<128x1xi32>
    %c16_i32 = arith.constant 16 : i32
    %44 = vector.broadcast %c16_i32 : i32 to vector<128x1xi32>
    %45 = arith.cmpi slt, %37, %44 : vector<128x1xi32>
    %cst_10 = arith.constant -1.250000e-01 : f32
    %cst_11 = arith.constant 0.000000e+00 : f32
    %46 = vector.broadcast %cst_10 : f32 to vector<128x1xf32>
    %47 = vector.broadcast %cst_11 : f32 to vector<128x1xf32>
    %48 = arith.select %45, %46, %47 : vector<128x1xi1>, vector<128x1xf32>
    %cst_12 = arith.constant 1.250000e-01 : f32
    %49 = vector.broadcast %cst_12 : f32 to vector<128x1xf32>
    %50 = arith.select %43, %49, %48 : vector<128x1xi1>, vector<128x1xf32>
    %c8_i32_13 = arith.constant 8 : i32
    %51 = vector.broadcast %c8_i32_13 : i32 to vector<1x128xi32>
    %52 = arith.cmpi slt, %41, %51 : vector<1x128xi32>
    %c16_i32_14 = arith.constant 16 : i32
    %53 = vector.broadcast %c16_i32_14 : i32 to vector<1x128xi32>
    %54 = arith.cmpi slt, %41, %53 : vector<1x128xi32>
    %cst_15 = arith.constant -1.250000e-01 : f32
    %cst_16 = arith.constant 0.000000e+00 : f32
    %55 = vector.broadcast %cst_15 : f32 to vector<1x128xf32>
    %56 = vector.broadcast %cst_16 : f32 to vector<1x128xf32>
    %57 = arith.select %54, %55, %56 : vector<1x128xi1>, vector<1x128xf32>
    %cst_17 = arith.constant 1.250000e-01 : f32
    %58 = vector.broadcast %cst_17 : f32 to vector<1x128xf32>
    %59 = arith.select %52, %58, %57 : vector<1x128xi1>, vector<1x128xf32>
    %60 = vector.broadcast %59 : vector<1x128xf32> to vector<128x128xf32>
    %61 = arith.mulf %33, %60 : vector<128x128xf32>
    %cst_18 = arith.constant dense<0.000000e+00> : vector<128xf32>
    %62 = vector.multi_reduction <add>, %61, %cst_18 [1] : vector<128x128xf32> to vector<128xf32>
    %63 = vector.shape_cast %62 : vector<128xf32> to vector<128x1xf32>
    %64 = arith.mulf %63, %50 : vector<128x1xf32>
    %65 = vector.shape_cast %64 : vector<128x1xf32> to vector<1x128x1xf32>
    %cst_19 = arith.constant dense<0.000000e+00> : vector<1xf32>
    %66 = vector.multi_reduction <add>, %65, %cst_19 [1, 2] : vector<1x128x1xf32> to vector<1xf32>
    %67 = vector.shape_cast %66 : vector<1xf32> to vector<1x1x1xf32>
    %68 = vector.extract %67[0, 0, 0] : f32 from vector<1x1x1xf32>
    %69 = arith.cmpi sgt, %3, %1 : i32
    %cst_20 = arith.constant 2.000000e+00 : f32
    %cst_21 = arith.constant 1.000000e+00 : f32
    %70 = arith.select %69, %cst_20, %cst_21 : f32
    %71 = arith.mulf %70, %68 : f32
    %72 = vector.broadcast %71 : f32 to vector<1x8x128xf32>
    %c0_22 = arith.constant 0 : index
    %c0_23 = arith.constant 0 : index
    %c0_24 = arith.constant 0 : index
    %73 = vector.load %arg6[%c0_22, %c0_23, %c0_24] : memref<1x8x128xf32, #tpu.memory_space<vmem>>, vector<1x8x128xf32>
    tpu.vector_store %arg6[%c0_22, %c0_23, %c0_24], %72 {strides = array<i32>} : memref<1x8x128xf32, #tpu.memory_space<vmem>>, vector<1x8x128xf32>,
    return
  }
  func.func @transform_0(%arg0: i32, %arg1: memref<1xi32, #tpu.memory_space<smem>>, %arg2: memref<1xi32, #tpu.memory_space<smem>>) -> i32 {
    %c0_i32 = arith.constant 0 : i32
    %c0_i32_0 = arith.constant 0 : i32
    return %c0_i32 : i32
  }
  func.func @transform_1(%arg0: i32, %arg1: memref<1xi32, #tpu.memory_space<smem>>, %arg2: memref<1xi32, #tpu.memory_space<smem>>) -> (i32, i32) {
    %0 = arith.index_cast %arg0 : i32 to index
    %1 = memref.load %arg1[%0] : memref<1xi32, #tpu.memory_space<smem>>
    %c0_i32 = arith.constant 0 : i32
    %c0_i32_0 = arith.constant 0 : i32
    return %1, %c0_i32 : i32, i32
  }
  func.func @transform_2(%arg0: i32, %arg1: memref<1xi32, #tpu.memory_space<smem>>, %arg2: memref<1xi32, #tpu.memory_space<smem>>) -> (i32, i32) {
    %0 = arith.index_cast %arg0 : i32 to index
    %1 = memref.load %arg2[%0] : memref<1xi32, #tpu.memory_space<smem>>
    %c0_i32 = arith.constant 0 : i32
    %c0_i32_0 = arith.constant 0 : i32
    return %c0_i32, %1 : i32, i32
  }
  func.func @transform_3(%arg0: i32, %arg1: memref<1xi32, #tpu.memory_space<smem>>, %arg2: memref<1xi32, #tpu.memory_space<smem>>) -> (i32, i32, i32) {
    %c0_i32 = arith.constant 0 : i32
    %c0_i32_0 = arith.constant 0 : i32
    %c0_i32_1 = arith.constant 0 : i32
    return %arg0, %c0_i32, %c0_i32_0 : i32, i32, i32
  }
}

</mosaic_0001>

<llo_original>
// kernel: tpu_custom_call.1
$region0: #{tpu_custom_call.1}
  #allocation0 [shape = 'u32[]', space=smem, size = 0x4, offset = 0x4, fixed_abs, tag = 'smem constant byte address 0x4 - core index']
  #allocation1 [shape = 'u32[144,128]{1,0:T(1,128)}', space=vmem, size = 0x12000, scoped, tag = 'internal scratch']
  #allocation2 [shape = 's32[1]{0}', space=sflag, size = 0x4, scoped, tag = 'scoped memory for tpu_custom_call.1']
  #allocation3 [shape = 's32[1]{0:T(128)S(6)}', space=smem, size = 0x200, scoped, tag = 'prefetched SMEM operand 0']
  #allocation4 [shape = 's32[1]{0:T(128)S(6)}', space=smem, size = 0x200, scoped, tag = 'prefetched SMEM operand 1']
  #allocation5 [shape = 'f32[1]{0:T(128)S(6)}', space=smem, size = 0x200, scoped, tag = 'scoped memory for tpu_custom_call.1']
  %s0 = inlined_call_operand.<no memory space> [shape: s32[1], index: 0, kind: input, shape index: {}]
  %s1 = inlined_call_operand.<no memory space> [shape: s32[1], index: 1, kind: input, shape index: {}]
  %s2 = inlined_call_operand.<no memory space> [shape: f32[1], index: 2, kind: input, shape index: {}]
  %s3 = inlined_call_operand.hbm [shape: f32[128,128], index: 3, kind: input, shape index: {}]
  %s4 = inlined_call_operand.hbm [shape: f32[128,128], index: 4, kind: input, shape index: {}]
  %s5 = inlined_call_operand.hbm [shape: f32[1,8,128], index: 5, kind: output, shape index: {}]
  %s6 = sld [smem:[#allocation0]]
  $region30: #{tpu_custom_call.1} parent=0
    _
  %s8 = ssub.s32 1, %s6
  %s9 = scalar_select 0, %s8, %s6
  %10 = sst [smem:[#allocation3]] %s0
  %11 = sst [smem:[#allocation4]] %s1
  %12 = sst [smem:[#allocation5]] %s2
  $region1: #{tpu_custom_call.1} parent=0
    #allocation6 [shape = 'u8[65536]{0}', space=vmem, size = 0x10000, scoped, tag = 'input window, operand 3, single buffered']
    #allocation7 [shape = 's32[1]{0}', space=sflag, size = 0x4, scoped, tag = 'scoped memory for tpu_custom_call.1']
    #allocation8 [shape = 's32[1]{0}', space=sflag, size = 0x4, scoped, tag = 'scoped memory for tpu_custom_call.1']
    #allocation9 [shape = 'u8[65536]{0}', space=vmem, size = 0x10000, scoped, tag = 'input window, operand 4, single buffered']
    #allocation10 [shape = 's32[1]{0}', space=sflag, size = 0x4, scoped, tag = 'scoped memory for tpu_custom_call.1']
    #allocation11 [shape = 'u8[4096]{0}', space=vmem, size = 0x1000, scoped, tag = 'output window, operand 0, single buffered']
    %13 = vsyncpa [#allocation7], 0
    %14 = vsyncpa [#allocation10], 0
    %15 = vsyncpa [#allocation8], 0
    // Predicated region
    $region2: #{tpu_custom_call.1} parent=1 // pred_check
      _
    $region3: #{tpu_custom_call.1} parent=1 // pred_check_branch
      %17 = sbr.rel (0) target = $region5
    $region4: #{tpu_custom_call.1} parent=1 // pred_region
      _
    $region5: #{tpu_custom_call.1} parent=1 // pred_fallthru
      _
    // Predicated region
    $region6: #{tpu_custom_call.1} parent=1 // pred_check
      _
    $region7: #{tpu_custom_call.1} parent=1 // pred_check_branch
      %19 = sbr.rel (0) target = $region9
    $region8: #{tpu_custom_call.1} parent=1 // pred_region
      %s20 = sld [smem:[#allocation3]]
      %s21 = smul.u32 16, %s20
      %s23 = ssub.s32 2048, 2048
      %24 = vsyncadd [#allocation7], %s23
      %s25 = smul.addr %s21, 128
      %s26 = scalar_lea.hbm %s3, %s25
      %s27 = sshll.u32 [#allocation6], 4
      %s28 = int_to_ptr.vmem [resolvable:$true] %s27
      %33 = dma.hbm_to_vmem [thread:$0]  %s26, 2048, %s28, [#allocation7], 128, 128, 8
    $region9: #{tpu_custom_call.1} parent=1 // pred_fallthru
      _
    // Predicated region
    $region10: #{tpu_custom_call.1} parent=1 // pred_check
      _
    $region11: #{tpu_custom_call.1} parent=1 // pred_check_branch
      %35 = sbr.rel (0) target = $region13
    $region12: #{tpu_custom_call.1} parent=1 // pred_region
      %s36 = sld [smem:[#allocation4]]
      %s38 = ssub.s32 2048, 2048
      %39 = vsyncadd [#allocation10], %s38
      %s40 = smul.addr %s36, 128
      %s41 = scalar_lea.hbm %s4, %s40
      %s42 = sshll.u32 [#allocation9], 4
      %s43 = int_to_ptr.vmem [resolvable:$true] %s42
      %48 = dma.hbm_to_vmem [thread:$0]  %s41, 2048, %s43, [#allocation10], 128, 128, 8
    $region13: #{tpu_custom_call.1} parent=1 // pred_fallthru
      _
    // Predicated region
    $region14: #{tpu_custom_call.1} parent=1 // pred_check
      _
    $region15: #{tpu_custom_call.1} parent=1 // pred_check_branch
      %50 = sbr.rel (0) target = $region17
    $region16: #{tpu_custom_call.1} parent=1 // pred_region
      %51 = dma.done [#allocation7], 2048
    $region17: #{tpu_custom_call.1} parent=1 // pred_fallthru
      _
    // Predicated region
    $region18: #{tpu_custom_call.1} parent=1 // pred_check
      _
    $region19: #{tpu_custom_call.1} parent=1 // pred_check_branch
      %53 = sbr.rel (0) target = $region21
    $region20: #{tpu_custom_call.1} parent=1 // pred_region
      %54 = dma.done [#allocation10], 2048
    $region21: #{tpu_custom_call.1} parent=1 // pred_fallthru
      _
    %s55 = sld [smem:[#allocation3]]
    %s56 = smul.u32 16, %s55
    %s57 = sld [smem:[#allocation4]]
    %s58 = sld [smem:[#allocation3]]
    %s59 = sld [smem:[#allocation4]]
    %v60 = vld [vmem:[#allocation6] sm:$0xff]
    %v61 = vld [vmem:[#allocation6 + $0x8] sm:$0xff]
    %v62 = vld [vmem:[#allocation6 + $0x10] sm:$0xff]
    %v63 = vld [vmem:[#allocation6 + $0x18] sm:$0xff]
    %v64 = vld [vmem:[#allocation6 + $0x20] sm:$0xff]
    %v65 = vld [vmem:[#allocation6 + $0x28] sm:$0xff]
    %v66 = vld [vmem:[#allocation6 + $0x30] sm:$0xff]
    %v67 = vld [vmem:[#allocation6 + $0x38] sm:$0xff]
    %v68 = vld [vmem:[#allocation6 + $0x40] sm:$0xff]
    %v69 = vld [vmem:[#allocation6 + $0x48] sm:$0xff]
    %v70 = vld [vmem:[#allocation6 + $0x50] sm:$0xff]
    %v71 = vld [vmem:[#allocation6 + $0x58] sm:$0xff]
    %v72 = vld [vmem:[#allocation6 + $0x60] sm:$0xff]
    %v73 = vld [vmem:[#allocation6 + $0x68] sm:$0xff]
    %v74 = vld [vmem:[#allocation6 + $0x70] sm:$0xff]
    %v75 = vld [vmem:[#allocation6 + $0x78] sm:$0xff]
    %v76 = vld [vmem:[#allocation9] sm:$0xff]
    %v77 = vld [vmem:[#allocation9 + $0x8] sm:$0xff]
    %v78 = vld [vmem:[#allocation9 + $0x10] sm:$0xff]
    %v79 = vld [vmem:[#allocation9 + $0x18] sm:$0xff]
    %v80 = vld [vmem:[#allocation9 + $0x20] sm:$0xff]
    %v81 = vld [vmem:[#allocation9 + $0x28] sm:$0xff]
    %v82 = vld [vmem:[#allocation9 + $0x30] sm:$0xff]
    %v83 = vld [vmem:[#allocation9 + $0x38] sm:$0xff]
    %v84 = vld [vmem:[#allocation9 + $0x40] sm:$0xff]
    %v85 = vld [vmem:[#allocation9 + $0x48] sm:$0xff]
    %v86 = vld [vmem:[#allocation9 + $0x50] sm:$0xff]
    %v87 = vld [vmem:[#allocation9 + $0x58] sm:$0xff]
    %v88 = vld [vmem:[#allocation9 + $0x60] sm:$0xff]
    %v89 = vld [vmem:[#allocation9 + $0x68] sm:$0xff]
    %v90 = vld [vmem:[#allocation9 + $0x70] sm:$0xff]
    %v91 = vld [vmem:[#allocation9 + $0x78] sm:$0xff]
    %v92 = vmul.f32 %v60, %v60
    %v93 = vmul.f32 %v61, %v61
    %v94 = vmul.f32 %v62, %v62
    %v95 = vmul.f32 %v63, %v63
    %v96 = vmul.f32 %v64, %v64
    %v97 = vmul.f32 %v65, %v65
    %v98 = vmul.f32 %v66, %v66
    %v99 = vmul.f32 %v67, %v67
    %v100 = vmul.f32 %v68, %v68
    %v101 = vmul.f32 %v69, %v69
    %v102 = vmul.f32 %v70, %v70
    %v103 = vmul.f32 %v71, %v71
    %v104 = vmul.f32 %v72, %v72
    %v105 = vmul.f32 %v73, %v73
    %v106 = vmul.f32 %v74, %v74
    %v107 = vmul.f32 %v75, %v75
    %108 = vadd.xlane.f32.xlu0 %v92
    %v109 = vpop.xlane.xlu0 %108
    %110 = vadd.xlane.f32.xlu0 %v93
    %v111 = vpop.xlane.xlu0 %110
    %112 = vadd.xlane.f32.xlu0 %v94
    %v113 = vpop.xlane.xlu0 %112
    %114 = vadd.xlane.f32.xlu0 %v95
    %v115 = vpop.xlane.xlu0 %114
    %116 = vadd.xlane.f32.xlu0 %v96
    %v117 = vpop.xlane.xlu0 %116
    %118 = vadd.xlane.f32.xlu0 %v97
    %v119 = vpop.xlane.xlu0 %118
    %120 = vadd.xlane.f32.xlu0 %v98
    %v121 = vpop.xlane.xlu0 %120
    %122 = vadd.xlane.f32.xlu0 %v99
    %v123 = vpop.xlane.xlu0 %122
    %124 = vadd.xlane.f32.xlu0 %v100
    %v125 = vpop.xlane.xlu0 %124
    %126 = vadd.xlane.f32.xlu0 %v101
    %v127 = vpop.xlane.xlu0 %126
    %128 = vadd.xlane.f32.xlu0 %v102
    %v129 = vpop.xlane.xlu0 %128
    %130 = vadd.xlane.f32.xlu0 %v103
    %v131 = vpop.xlane.xlu0 %130
    %132 = vadd.xlane.f32.xlu0 %v104
    %v133 = vpop.xlane.xlu0 %132
    %134 = vadd.xlane.f32.xlu0 %v105
    %v135 = vpop.xlane.xlu0 %134
    %136 = vadd.xlane.f32.xlu0 %v106
    %v137 = vpop.xlane.xlu0 %136
    %138 = vadd.xlane.f32.xlu0 %v107
    %v139 = vpop.xlane.xlu0 %138
    %v140 = vmul.f32 %v76, %v76
    %v141 = vmul.f32 %v77, %v77
    %v142 = vmul.f32 %v78, %v78
    %v143 = vmul.f32 %v79, %v79
    %v144 = vmul.f32 %v80, %v80
    %v145 = vmul.f32 %v81, %v81
    %v146 = vmul.f32 %v82, %v82
    %v147 = vmul.f32 %v83, %v83
    %v148 = vmul.f32 %v84, %v84
    %v149 = vmul.f32 %v85, %v85
    %v150 = vmul.f32 %v86, %v86
    %v151 = vmul.f32 %v87, %v87
    %v152 = vmul.f32 %v88, %v88
    %v153 = vmul.f32 %v89, %v89
    %v154 = vmul.f32 %v90, %v90
    %v155 = vmul.f32 %v91, %v91
    %v156 = vadd.f32 %v140, %v141
    %v157 = vadd.f32 %v156, %v142
    %v158 = vadd.f32 %v157, %v143
    %v159 = vadd.f32 %v158, %v144
    %v160 = vadd.f32 %v159, %v145
    %v161 = vadd.f32 %v160, %v146
    %v162 = vadd.f32 %v161, %v147
    %v163 = vadd.f32 %v162, %v148
    %v164 = vadd.f32 %v163, %v149
    %v165 = vadd.f32 %v164, %v150
    %v166 = vadd.f32 %v165, %v151
    %v167 = vadd.f32 %v166, %v152
    %v168 = vadd.f32 %v167, %v153
    %v169 = vadd.f32 %v168, %v154
    %v170 = vadd.f32 %v169, %v155
    %v171 = vrot.slane %v170, 4
    %v172 = vadd.f32 %v170, %v171
    %v173 = vrot.slane %v172, 2
    %v174 = vadd.f32 %v172, %v173
    %v175 = vrot.slane %v174, 1
    %v176 = vadd.f32 %v174, %v175
    %177 = vmatprep.subr.mxu0 0.0
    %178 = vmatpush1.msra.mxu0 %v76
    %179 = vmatprep.subr.mxu0 0.0
    %180 = vmatpush1.msra.mxu0 %v77
    %181 = vmatprep.subr.mxu0 0.0
    %182 = vmatpush1.msra.mxu0 %v78
    %183 = vmatprep.subr.mxu0 0.0
    %184 = vmatpush1.msra.mxu0 %v79
    %185 = vmatprep.subr.mxu0 0.0
    %186 = vmatpush1.msra.mxu0 %v80
    %187 = vmatprep.subr.mxu0 0.0
    %188 = vmatpush1.msra.mxu0 %v81
    %189 = vmatprep.subr.mxu0 0.0
    %190 = vmatpush1.msra.mxu0 %v82
    %191 = vmatprep.subr.mxu0 0.0
    %192 = vmatpush1.msra.mxu0 %v83
    %193 = vmatprep.subr.mxu0 0.0
    %194 = vmatpush1.msra.mxu0 %v84
    %195 = vmatprep.subr.mxu0 0.0
    %196 = vmatpush1.msra.mxu0 %v85
    %197 = vmatprep.subr.mxu0 0.0
    %198 = vmatpush1.msra.mxu0 %v86
    %199 = vmatprep.subr.mxu0 0.0
    %200 = vmatpush1.msra.mxu0 %v87
    %201 = vmatprep.subr.mxu0 0.0
    %202 = vmatpush1.msra.mxu0 %v88
    %203 = vmatprep.subr.mxu0 0.0
    %204 = vmatpush1.msra.mxu0 %v89
    %205 = vmatprep.subr.mxu0 0.0
    %206 = vmatpush1.msra.mxu0 %v90
    %207 = vmatprep.subr.mxu0 0.0
    %208 = vmatpush1.msra.mxu0 %v91
    %209 = vmatprep.subr.mxu0 0.0
    %210 = vmatpush1.msra.mxu0 0.0
    %211 = vmatprep.subr.mxu0 0.0
    %212 = vmatpush1.msra.mxu0 0.0
    %213 = vmatprep.subr.mxu0 0.0
    %214 = vmatpush1.msra.mxu0 0.0
    %215 = vmatprep.subr.mxu0 0.0
    %216 = vmatpush1.msra.mxu0 0.0
    %217 = vmatprep.subr.mxu0 0.0
    %218 = vmatpush1.msra.mxu0 0.0
    %219 = vmatprep.subr.mxu0 0.0
    %220 = vmatpush1.msra.mxu0 0.0
    %221 = vmatprep.subr.mxu0 0.0
    %222 = vmatpush1.msra.mxu0 0.0
    %223 = vmatprep.subr.mxu0 0.0
    %224 = vmatpush1.msra.mxu0 0.0
    %225 = vmatprep.subr.mxu0 0.0
    %226 = vmatpush1.msra.mxu0 0.0
    %227 = vmatprep.subr.mxu0 0.0
    %228 = vmatpush1.msra.mxu0 0.0
    %229 = vmatprep.subr.mxu0 0.0
    %230 = vmatpush1.msra.mxu0 0.0
    %231 = vmatprep.subr.mxu0 0.0
    %232 = vmatpush1.msra.mxu0 0.0
    %233 = vmatprep.subr.mxu0 0.0
    %234 = vmatpush1.msra.mxu0 0.0
    %235 = vmatprep.subr.mxu0 0.0
    %236 = vmatpush1.msra.mxu0 0.0
    %237 = vmatprep.subr.mxu0 0.0
    %238 = vmatpush1.msra.mxu0 0.0
    %239 = vmatprep.subr.mxu0 0.0
    %240 = vmatpush1.msra.mxu0 0.0
    %241 = vmatprep.mubr.f32.mxu0 0.0
    %242 = vmatmul.mubr.f32.gmra.mrb[0].mxu0 %v60
    %v243 = vpop.f32.mrb[0].mxu0
    %v244 = vadd.f32 0.0, %v243
    %v245 = vpop.f32.mrb[0].mxu0
    %246 = vmatprep.mubr.f32.mxu0 0.0
    %247 = vmatmul.mubr.f32.gmra.mrb[0].mxu0 %v61
    %v248 = vpop.f32.mrb[0].mxu0
    %v249 = vadd.f32 0.0, %v248
    %v250 = vpop.f32.mrb[0].mxu0
    %251 = vmatprep.mubr.f32.mxu0 0.0
    %252 = vmatmul.mubr.f32.gmra.mrb[0].mxu0 %v62
    %v253 = vpop.f32.mrb[0].mxu0
    %v254 = vadd.f32 0.0, %v253
    %v255 = vpop.f32.mrb[0].mxu0
    %256 = vmatprep.mubr.f32.mxu0 0.0
    %257 = vmatmul.mubr.f32.gmra.mrb[0].mxu0 %v63
    %v258 = vpop.f32.mrb[0].mxu0
    %v259 = vadd.f32 0.0, %v258
    %v260 = vpop.f32.mrb[0].mxu0
    %261 = vmatprep.mubr.f32.mxu0 0.0
    %262 = vmatmul.mubr.f32.gmra.mrb[0].mxu0 %v64
    %v263 = vpop.f32.mrb[0].mxu0
    %v264 = vadd.f32 0.0, %v263
    %v265 = vpop.f32.mrb[0].mxu0
    %266 = vmatprep.mubr.f32.mxu0 0.0
    %267 = vmatmul.mubr.f32.gmra.mrb[0].mxu0 %v65
    %v268 = vpop.f32.mrb[0].mxu0
    %v269 = vadd.f32 0.0, %v268
    %v270 = vpop.f32.mrb[0].mxu0
    %271 = vmatprep.mubr.f32.mxu0 0.0
    %272 = vmatmul.mubr.f32.gmra.mrb[0].mxu0 %v66
    %v273 = vpop.f32.mrb[0].mxu0
    %v274 = vadd.f32 0.0, %v273
    %v275 = vpop.f32.mrb[0].mxu0
    %276 = vmatprep.mubr.f32.mxu0 0.0
    %277 = vmatmul.mubr.f32.gmra.mrb[0].mxu0 %v67
    %v278 = vpop.f32.mrb[0].mxu0
    %v279 = vadd.f32 0.0, %v278
    %v280 = vpop.f32.mrb[0].mxu0
    %281 = vmatprep.mubr.f32.mxu0 0.0
    %282 = vmatmul.mubr.f32.gmra.mrb[0].mxu0 %v68
    %v283 = vpop.f32.mrb[0].mxu0
    %v284 = vadd.f32 0.0, %v283
    %v285 = vpop.f32.mrb[0].mxu0
    %286 = vmatprep.mubr.f32.mxu0 0.0
    %287 = vmatmul.mubr.f32.gmra.mrb[0].mxu0 %v69
    %v288 = vpop.f32.mrb[0].mxu0
    %v289 = vadd.f32 0.0, %v288
    %v290 = vpop.f32.mrb[0].mxu0
    %291 = vmatprep.mubr.f32.mxu0 0.0
    %292 = vmatmul.mubr.f32.gmra.mrb[0].mxu0 %v70
    %v293 = vpop.f32.mrb[0].mxu0
    %v294 = vadd.f32 0.0, %v293
    %v295 = vpop.f32.mrb[0].mxu0
    %296 = vmatprep.mubr.f32.mxu0 0.0
    %297 = vmatmul.mubr.f32.gmra.mrb[0].mxu0 %v71
    %v298 = vpop.f32.mrb[0].mxu0
    %v299 = vadd.f32 0.0, %v298
    %v300 = vpop.f32.mrb[0].mxu0
    %301 = vmatprep.mubr.f32.mxu0 0.0
    %302 = vmatmul.mubr.f32.gmra.mrb[0].mxu0 %v72
    %v303 = vpop.f32.mrb[0].mxu0
    %v304 = vadd.f32 0.0, %v303
    %v305 = vpop.f32.mrb[0].mxu0
    %306 = vmatprep.mubr.f32.mxu0 0.0
    %307 = vmatmul.mubr.f32.gmra.mrb[0].mxu0 %v73
    %v308 = vpop.f32.mrb[0].mxu0
    %v309 = vadd.f32 0.0, %v308
    %v310 = vpop.f32.mrb[0].mxu0
    %311 = vmatprep.mubr.f32.mxu0 0.0
    %312 = vmatmul.mubr.f32.gmra.mrb[0].mxu0 %v74
    %v313 = vpop.f32.mrb[0].mxu0
    %v314 = vadd.f32 0.0, %v313
    %v315 = vpop.f32.mrb[0].mxu0
    %316 = vmatprep.mubr.f32.mxu0 0.0
    %317 = vmatmul.mubr.f32.gmra.mrb[0].mxu0 %v75
    %v318 = vpop.f32.mrb[0].mxu0
    %v319 = vadd.f32 0.0, %v318
    %v320 = vpop.f32.mrb[0].mxu0
    %321 = vdwg.mxu0
    %v322 = vadd.f32 %v109, %v176
    %v323 = vadd.f32 %v111, %v176
    %v324 = vadd.f32 %v113, %v176
    %v325 = vadd.f32 %v115, %v176
    %v326 = vadd.f32 %v117, %v176
    %v327 = vadd.f32 %v119, %v176
    %v328 = vadd.f32 %v121, %v176
    %v329 = vadd.f32 %v123, %v176
    %v330 = vadd.f32 %v125, %v176
    %v331 = vadd.f32 %v127, %v176
    %v332 = vadd.f32 %v129, %v176
    %v333 = vadd.f32 %v131, %v176
    %v334 = vadd.f32 %v133, %v176
    %v335 = vadd.f32 %v135, %v176
    %v336 = vadd.f32 %v137, %v176
    %v337 = vadd.f32 %v139, %v176
    %v338 = vmul.f32 %v244, 2.0
    %v339 = vmul.f32 %v249, 2.0
    %v340 = vmul.f32 %v254, 2.0
    %v341 = vmul.f32 %v259, 2.0
    %v342 = vmul.f32 %v264, 2.0
    %v343 = vmul.f32 %v269, 2.0
    %v344 = vmul.f32 %v274, 2.0
    %v345 = vmul.f32 %v279, 2.0
    %v346 = vmul.f32 %v284, 2.0
    %v347 = vmul.f32 %v289, 2.0
    %v348 = vmul.f32 %v294, 2.0
    %v349 = vmul.f32 %v299, 2.0
    %v350 = vmul.f32 %v304, 2.0
    %v351 = vmul.f32 %v309, 2.0
    %v352 = vmul.f32 %v314, 2.0
    %v353 = vmul.f32 %v319, 2.0
    %v354 = vsub.f32 %v322, %v338
    %v355 = vsub.f32 %v323, %v339
    %v356 = vsub.f32 %v324, %v340
    %v357 = vsub.f32 %v325, %v341
    %v358 = vsub.f32 %v326, %v342
    %v359 = vsub.f32 %v327, %v343
    %v360 = vsub.f32 %v328, %v344
    %v361 = vsub.f32 %v329, %v345
    %v362 = vsub.f32 %v330, %v346
    %v363 = vsub.f32 %v331, %v347
    %v364 = vsub.f32 %v332, %v348
    %v365 = vsub.f32 %v333, %v349
    %v366 = vsub.f32 %v334, %v350
    %v367 = vsub.f32 %v335, %v351
    %v368 = vsub.f32 %v336, %v352
    %v369 = vsub.f32 %v337, %v353
    %v370 = vmax.f32 %v354, 0.0
    %v371 = vmax.f32 %v355, 0.0
    %v372 = vmax.f32 %v356, 0.0
    %v373 = vmax.f32 %v357, 0.0
    %v374 = vmax.f32 %v358, 0.0
    %v375 = vmax.f32 %v359, 0.0
    %v376 = vmax.f32 %v360, 0.0
    %v377 = vmax.f32 %v361, 0.0
    %v378 = vmax.f32 %v362, 0.0
    %v379 = vmax.f32 %v363, 0.0
    %v380 = vmax.f32 %v364, 0.0
    %v381 = vmax.f32 %v365, 0.0
    %v382 = vmax.f32 %v366, 0.0
    %v383 = vmax.f32 %v367, 0.0
    %v384 = vmax.f32 %v368, 0.0
    %v385 = vmax.f32 %v369, 0.0
    %s386 = sld [smem:[#allocation5]]
    %s387 = smul.f32 %s386, 0.25
    %v388 = vstv %s387
    %v389 = vmul.f32 %v370, %v388
    %v390 = vmul.f32 %v371, %v388
    %v391 = vmul.f32 %v372, %v388
    %v392 = vmul.f32 %v373, %v388
    %v393 = vmul.f32 %v374, %v388
    %v394 = vmul.f32 %v375, %v388
    %v395 = vmul.f32 %v376, %v388
    %v396 = vmul.f32 %v377, %v388
    %v397 = vmul.f32 %v378, %v388
    %v398 = vmul.f32 %v379, %v388
    %v399 = vmul.f32 %v380, %v388
    %v400 = vmul.f32 %v381, %v388
    %v401 = vmul.f32 %v382, %v388
    %v402 = vmul.f32 %v383, %v388
    %v403 = vmul.f32 %v384, %v388
    %v404 = vmul.f32 %v385, %v388
    %v405 = vmul.f32 %v389, 1.442695
    %v406 = vpow.pop %v405
    %v407 = vmul.f32 %v390, 1.442695
    %v408 = vpow.pop %v407
    %v409 = vmul.f32 %v391, 1.442695
    %v410 = vpow.pop %v409
    %v411 = vmul.f32 %v392, 1.442695
    %v412 = vpow.pop %v411
    %v413 = vmul.f32 %v393, 1.442695
    %v414 = vpow.pop %v413
    %v415 = vmul.f32 %v394, 1.442695
    %v416 = vpow.pop %v415
    %v417 = vmul.f32 %v395, 1.442695
    %v418 = vpow.pop %v417
    %v419 = vmul.f32 %v396, 1.442695
    %v420 = vpow.pop %v419
    %v421 = vmul.f32 %v397, 1.442695
    %v422 = vpow.pop %v421
    %v423 = vmul.f32 %v398, 1.442695
    %v424 = vpow.pop %v423
    %v425 = vmul.f32 %v399, 1.442695
    %v426 = vpow.pop %v425
    %v427 = vmul.f32 %v400, 1.442695
    %v428 = vpow.pop %v427
    %v429 = vmul.f32 %v401, 1.442695
    %v430 = vpow.pop %v429
    %v431 = vmul.f32 %v402, 1.442695
    %v432 = vpow.pop %v431
    %v433 = vmul.f32 %v403, 1.442695
    %v434 = vpow.pop %v433
    %v435 = vmul.f32 %v404, 1.442695
    %v436 = vpow.pop %v435
    %v437 = vmul.f32 %v406, %v406
    %v438 = vmul.f32 %v408, %v408
    %v439 = vmul.f32 %v410, %v410
    %v440 = vmul.f32 %v412, %v412
    %v441 = vmul.f32 %v414, %v414
    %v442 = vmul.f32 %v416, %v416
    %v443 = vmul.f32 %v418, %v418
    %v444 = vmul.f32 %v420, %v420
    %v445 = vmul.f32 %v422, %v422
    %v446 = vmul.f32 %v424, %v424
    %v447 = vmul.f32 %v426, %v426
    %v448 = vmul.f32 %v428, %v428
    %v449 = vmul.f32 %v430, %v430
    %v450 = vmul.f32 %v432, %v432
    %v451 = vmul.f32 %v434, %v434
    %v452 = vmul.f32 %v436, %v436
    %v453 = vadd.f32 %v406, %v437
    %v454 = vadd.f32 %v408, %v438
    %v455 = vadd.f32 %v410, %v439
    %v456 = vadd.f32 %v412, %v440
    %v457 = vadd.f32 %v414, %v441
    %v458 = vadd.f32 %v416, %v442
    %v459 = vadd.f32 %v418, %v443
    %v460 = vadd.f32 %v420, %v444
    %v461 = vadd.f32 %v422, %v445
    %v462 = vadd.f32 %v424, %v446
    %v463 = vadd.f32 %v426, %v447
    %v464 = vadd.f32 %v428, %v448
    %v465 = vadd.f32 %v430, %v449
    %v466 = vadd.f32 %v432, %v450
    %v467 = vadd.f32 %v434, %v451
    %v468 = vadd.f32 %v436, %v452
    %v469 = vmul.f32 %v437, %v437
    %v470 = vmul.f32 %v438, %v438
    %v471 = vmul.f32 %v439, %v439
    %v472 = vmul.f32 %v440, %v440
    %v473 = vmul.f32 %v441, %v441
    %v474 = vmul.f32 %v442, %v442
    %v475 = vmul.f32 %v443, %v443
    %v476 = vmul.f32 %v444, %v444
    %v477 = vmul.f32 %v445, %v445
    %v478 = vmul.f32 %v446, %v446
    %v479 = vmul.f32 %v447, %v447
    %v480 = vmul.f32 %v448, %v448
    %v481 = vmul.f32 %v449, %v449
    %v482 = vmul.f32 %v450, %v450
    %v483 = vmul.f32 %v451, %v451
    %v484 = vmul.f32 %v452, %v452
    %v485 = vadd.f32 %v453, %v469
    %v486 = vadd.f32 %v454, %v470
    %v487 = vadd.f32 %v455, %v471
    %v488 = vadd.f32 %v456, %v472
    %v489 = vadd.f32 %v457, %v473
    %v490 = vadd.f32 %v458, %v474
    %v491 = vadd.f32 %v459, %v475
    %v492 = vadd.f32 %v460, %v476
    %v493 = vadd.f32 %v461, %v477
    %v494 = vadd.f32 %v462, %v478
    %v495 = vadd.f32 %v463, %v479
    %v496 = vadd.f32 %v464, %v480
    %v497 = vadd.f32 %v465, %v481
    %v498 = vadd.f32 %v466, %v482
    %v499 = vadd.f32 %v467, %v483
    %v500 = vadd.f32 %v468, %v484
    %v501 = vmul.f32 %v469, %v469
    %v502 = vmul.f32 %v470, %v470
    %v503 = vmul.f32 %v471, %v471
    %v504 = vmul.f32 %v472, %v472
    %v505 = vmul.f32 %v473, %v473
    %v506 = vmul.f32 %v474, %v474
    %v507 = vmul.f32 %v475, %v475
    %v508 = vmul.f32 %v476, %v476
    %v509 = vmul.f32 %v477, %v477
    %v510 = vmul.f32 %v478, %v478
    %v511 = vmul.f32 %v479, %v479
    %v512 = vmul.f32 %v480, %v480
    %v513 = vmul.f32 %v481, %v481
    %v514 = vmul.f32 %v482, %v482
    %v515 = vmul.f32 %v483, %v483
    %v516 = vmul.f32 %v484, %v484
    %v517 = vadd.f32 %v485, %v501
    %v518 = vadd.f32 %v486, %v502
    %v519 = vadd.f32 %v487, %v503
    %v520 = vadd.f32 %v488, %v504
    %v521 = vadd.f32 %v489, %v505
    %v522 = vadd.f32 %v490, %v506
    %v523 = vadd.f32 %v491, %v507
    %v524 = vadd.f32 %v492, %v508
    %v525 = vadd.f32 %v493, %v509
    %v526 = vadd.f32 %v494, %v510
    %v527 = vadd.f32 %v495, %v511
    %v528 = vadd.f32 %v496, %v512
    %v529 = vadd.f32 %v497, %v513
    %v530 = vadd.f32 %v498, %v514
    %v531 = vadd.f32 %v499, %v515
    %v532 = vadd.f32 %v500, %v516
    %v533 = vmul.f32 %v501, %v501
    %v534 = vmul.f32 %v502, %v502
    %v535 = vmul.f32 %v503, %v503
    %v536 = vmul.f32 %v504, %v504
    %v537 = vmul.f32 %v505, %v505
    %v538 = vmul.f32 %v506, %v506
    %v539 = vmul.f32 %v507, %v507
    %v540 = vmul.f32 %v508, %v508
    %v541 = vmul.f32 %v509, %v509
    %v542 = vmul.f32 %v510, %v510
    %v543 = vmul.f32 %v511, %v511
    %v544 = vmul.f32 %v512, %v512
    %v545 = vmul.f32 %v513, %v513
    %v546 = vmul.f32 %v514, %v514
    %v547 = vmul.f32 %v515, %v515
    %v548 = vmul.f32 %v516, %v516
    %v549 = vadd.f32 %v517, %v533
    %v550 = vadd.f32 %v518, %v534
    %v551 = vadd.f32 %v519, %v535
    %v552 = vadd.f32 %v520, %v536
    %v553 = vadd.f32 %v521, %v537
    %v554 = vadd.f32 %v522, %v538
    %v555 = vadd.f32 %v523, %v539
    %v556 = vadd.f32 %v524, %v540
    %v557 = vadd.f32 %v525, %v541
    %v558 = vadd.f32 %v526, %v542
    %v559 = vadd.f32 %v527, %v543
    %v560 = vadd.f32 %v528, %v544
    %v561 = vadd.f32 %v529, %v545
    %v562 = vadd.f32 %v530, %v546
    %v563 = vadd.f32 %v531, %v547
    %v564 = vadd.f32 %v532, %v548
    %s565 = smul.u32 %s58, 128
    %v566 = vlaneseq
    %v567 = vshrl.u32 %v566, 7
    %v568 = vadd.s32 %v567, 8
    %v569 = vadd.s32 %v567, 16
    %v570 = vadd.s32 %v567, 24
    %v571 = vadd.s32 %v567, 32
    %v572 = vadd.s32 %v567, 40
    %v573 = vadd.s32 %v567, 48
    %v574 = vadd.s32 %v567, 56
    %v575 = vadd.s32 %v567, 64
    %v576 = vadd.s32 %v567, 72
    %v577 = vadd.s32 %v567, 80
    %v578 = vadd.s32 %v567, 88
    %v579 = vadd.s32 %v567, 96
    %v580 = vadd.s32 %v567, 104
    %v581 = vadd.s32 %v567, 112
    %v582 = vadd.s32 %v567, 120
    %v583 = vstv %s565
    %v584 = vadd.s32 %v583, %v567
    %v585 = vadd.s32 %v583, %v568
    %v586 = vadd.s32 %v583, %v569
    %v587 = vadd.s32 %v583, %v570
    %v588 = vadd.s32 %v583, %v571
    %v589 = vadd.s32 %v583, %v572
    %v590 = vadd.s32 %v583, %v573
    %v591 = vadd.s32 %v583, %v574
    %v592 = vadd.s32 %v583, %v575
    %v593 = vadd.s32 %v583, %v576
    %v594 = vadd.s32 %v583, %v577
    %v595 = vadd.s32 %v583, %v578
    %v596 = vadd.s32 %v583, %v579
    %v597 = vadd.s32 %v583, %v580
    %v598 = vadd.s32 %v583, %v581
    %v599 = vadd.s32 %v583, %v582
    %s600 = smul.u32 %s59, 128
    %v601 = vlaneseq
    %v602 = vand.u32 %v601, 127
    %v603 = vstv %s600
    %v604 = vadd.s32 %v603, %v602
    %vm605 = vcmp.lt.s32.totalorder %v584, 8
    %vm606 = vcmp.lt.s32.totalorder %v585, 8
    %vm607 = vcmp.lt.s32.totalorder %v586, 8
    %vm608 = vcmp.lt.s32.totalorder %v587, 8
    %vm609 = vcmp.lt.s32.totalorder %v588, 8
    %vm610 = vcmp.lt.s32.totalorder %v589, 8
    %vm611 = vcmp.lt.s32.totalorder %v590, 8
    %vm612 = vcmp.lt.s32.totalorder %v591, 8
    %vm613 = vcmp.lt.s32.totalorder %v592, 8
    %vm614 = vcmp.lt.s32.totalorder %v593, 8
    %vm615 = vcmp.lt.s32.totalorder %v594, 8
    %vm616 = vcmp.lt.s32.totalorder %v595, 8
    %vm617 = vcmp.lt.s32.totalorder %v596, 8
    %vm618 = vcmp.lt.s32.totalorder %v597, 8
    %vm619 = vcmp.lt.s32.totalorder %v598, 8
    %vm620 = vcmp.lt.s32.totalorder %v599, 8
    %vm621 = vcmp.lt.s32.totalorder %v584, 16
    %vm622 = vcmp.lt.s32.totalorder %v585, 16
    %vm623 = vcmp.lt.s32.totalorder %v586, 16
    %vm624 = vcmp.lt.s32.totalorder %v587, 16
    %vm625 = vcmp.lt.s32.totalorder %v588, 16
    %vm626 = vcmp.lt.s32.totalorder %v589, 16
    %vm627 = vcmp.lt.s32.totalorder %v590, 16
    %vm628 = vcmp.lt.s32.totalorder %v591, 16
    %vm629 = vcmp.lt.s32.totalorder %v592, 16
    %vm630 = vcmp.lt.s32.totalorder %v593, 16
    %vm631 = vcmp.lt.s32.totalorder %v594, 16
    %vm632 = vcmp.lt.s32.totalorder %v595, 16
    %vm633 = vcmp.lt.s32.totalorder %v596, 16
    %vm634 = vcmp.lt.s32.totalorder %v597, 16
    %vm635 = vcmp.lt.s32.totalorder %v598, 16
    %vm636 = vcmp.lt.s32.totalorder %v599, 16
    %v637 = vsel %vm621, -0.125, 0.0
    %v638 = vsel %vm622, -0.125, 0.0
    %v639 = vsel %vm623, -0.125, 0.0
    %v640 = vsel %vm624, -0.125, 0.0
    %v641 = vsel %vm625, -0.125, 0.0
    %v642 = vsel %vm626, -0.125, 0.0
    %v643 = vsel %vm627, -0.125, 0.0
    %v644 = vsel %vm628, -0.125, 0.0
    %v645 = vsel %vm629, -0.125, 0.0
    %v646 = vsel %vm630, -0.125, 0.0
    %v647 = vsel %vm631, -0.125, 0.0
    %v648 = vsel %vm632, -0.125, 0.0
    %v649 = vsel %vm633, -0.125, 0.0
    %v650 = vsel %vm634, -0.125, 0.0
    %v651 = vsel %vm635, -0.125, 0.0
    %v652 = vsel %vm636, -0.125, 0.0
    %v653 = vsel %vm605, 0.125, %v637
    %v654 = vsel %vm606, 0.125, %v638
    %v655 = vsel %vm607, 0.125, %v639
    %v656 = vsel %vm608, 0.125, %v640
    %v657 = vsel %vm609, 0.125, %v641
    %v658 = vsel %vm610, 0.125, %v642
    %v659 = vsel %vm611, 0.125, %v643
    %v660 = vsel %vm612, 0.125, %v644
    %v661 = vsel %vm613, 0.125, %v645
    %v662 = vsel %vm614, 0.125, %v646
    %v663 = vsel %vm615, 0.125, %v647
    %v664 = vsel %vm616, 0.125, %v648
    %v665 = vsel %vm617, 0.125, %v649
    %v666 = vsel %vm618, 0.125, %v650
    %v667 = vsel %vm619, 0.125, %v651
    %v668 = vsel %vm620, 0.125, %v652
    %vm669 = vcmp.lt.s32.totalorder %v604, 8
    %vm670 = vcmp.lt.s32.totalorder %v604, 16
    %v671 = vsel %vm670, -0.125, 0.0
    %v672 = vsel %vm669, 0.125, %v671
    %v673 = vmul.f32 %v549, %v672
    %v674 = vmul.f32 %v550, %v672
    %v675 = vmul.f32 %v551, %v672
    %v676 = vmul.f32 %v552, %v672
    %v677 = vmul.f32 %v553, %v672
    %v678 = vmul.f32 %v554, %v672
    %v679 = vmul.f32 %v555, %v672
    %v680 = vmul.f32 %v556, %v672
    %v681 = vmul.f32 %v557, %v672
    %v682 = vmul.f32 %v558, %v672
    %v683 = vmul.f32 %v559, %v672
    %v684 = vmul.f32 %v560, %v672
    %v685 = vmul.f32 %v561, %v672
    %v686 = vmul.f32 %v562, %v672
    %v687 = vmul.f32 %v563, %v672
    %v688 = vmul.f32 %v564, %v672
    %689 = vadd.xlane.f32.xlu0 %v673
    %v690 = vpop.xlane.xlu0 %689
    %691 = vadd.xlane.f32.xlu0 %v674
    %v692 = vpop.xlane.xlu0 %691
    %693 = vadd.xlane.f32.xlu0 %v675
    %v694 = vpop.xlane.xlu0 %693
    %695 = vadd.xlane.f32.xlu0 %v676
    %v696 = vpop.xlane.xlu0 %695
    %697 = vadd.xlane.f32.xlu0 %v677
    %v698 = vpop.xlane.xlu0 %697
    %699 = vadd.xlane.f32.xlu0 %v678
    %v700 = vpop.xlane.xlu0 %699
    %701 = vadd.xlane.f32.xlu0 %v679
    %v702 = vpop.xlane.xlu0 %701
    %703 = vadd.xlane.f32.xlu0 %v680
    %v704 = vpop.xlane.xlu0 %703
    %705 = vadd.xlane.f32.xlu0 %v681
    %v706 = vpop.xlane.xlu0 %705
    %707 = vadd.xlane.f32.xlu0 %v682
    %v708 = vpop.xlane.xlu0 %707
    %709 = vadd.xlane.f32.xlu0 %v683
    %v710 = vpop.xlane.xlu0 %709
    %711 = vadd.xlane.f32.xlu0 %v684
    %v712 = vpop.xlane.xlu0 %711
    %713 = vadd.xlane.f32.xlu0 %v685
    %v714 = vpop.xlane.xlu0 %713
    %715 = vadd.xlane.f32.xlu0 %v686
    %v716 = vpop.xlane.xlu0 %715
    %717 = vadd.xlane.f32.xlu0 %v687
    %v718 = vpop.xlane.xlu0 %717
    %719 = vadd.xlane.f32.xlu0 %v688
    %v720 = vpop.xlane.xlu0 %719
    %v721 = vmul.f32 %v690, %v653
    %v722 = vmul.f32 %v692, %v654
    %v723 = vmul.f32 %v694, %v655
    %v724 = vmul.f32 %v696, %v656
    %v725 = vmul.f32 %v698, %v657
    %v726 = vmul.f32 %v700, %v658
    %v727 = vmul.f32 %v702, %v659
    %v728 = vmul.f32 %v704, %v660
    %v729 = vmul.f32 %v706, %v661
    %v730 = vmul.f32 %v708, %v662
    %v731 = vmul.f32 %v710, %v663
    %v732 = vmul.f32 %v712, %v664
    %v733 = vmul.f32 %v714, %v665
    %v734 = vmul.f32 %v716, %v666
    %v735 = vmul.f32 %v718, %v667
    %v736 = vmul.f32 %v720, %v668
    %vm737 = vcmask 7168
    %v738 = vsel %vm737, %v721, 0.0
    %v739 = vsel %vm737, %v722, 0.0
    %v740 = vadd.f32 %v738, %v739
    %v741 = vsel %vm737, %v723, 0.0
    %v742 = vadd.f32 %v740, %v741
    %v743 = vsel %vm737, %v724, 0.0
    %v744 = vadd.f32 %v742, %v743
    %v745 = vsel %vm737, %v725, 0.0
    %v746 = vadd.f32 %v744, %v745
    %v747 = vsel %vm737, %v726, 0.0
    %v748 = vadd.f32 %v746, %v747
    %v749 = vsel %vm737, %v727, 0.0
    %v750 = vadd.f32 %v748, %v749
    %v751 = vsel %vm737, %v728, 0.0
    %v752 = vadd.f32 %v750, %v751
    %v753 = vsel %vm737, %v729, 0.0
    %v754 = vadd.f32 %v752, %v753
    %v755 = vsel %vm737, %v730, 0.0
    %v756 = vadd.f32 %v754, %v755
    %v757 = vsel %vm737, %v731, 0.0
    %v758 = vadd.f32 %v756, %v757
    %v759 = vsel %vm737, %v732, 0.0
    %v760 = vadd.f32 %v758, %v759
    %v761 = vsel %vm737, %v733, 0.0
    %v762 = vadd.f32 %v760, %v761
    %v763 = vsel %vm737, %v734, 0.0
    %v764 = vadd.f32 %v762, %v763
    %v765 = vsel %vm737, %v735, 0.0
    %v766 = vadd.f32 %v764, %v765
    %v767 = vsel %vm737, %v736, 0.0
    %v768 = vadd.f32 %v766, %v767
    %769 = vadd.xlane.f32.xlu0 %v768
    %v770 = vpop.xlane.xlu0 %769
    %v771 = vrot.slane %v770, 4
    %v772 = vadd.f32 %v770, %v771
    %v773 = vrot.slane %v772, 2
    %v774 = vadd.f32 %v772, %v773
    %v775 = vrot.slane %v774, 1
    %v776 = vadd.f32 %v774, %v775
    %s777 = vtos %v776
    %p778 = scmp.gt.s32.totalorder %s59, %s58
    %s779 = scalar_select %p778, 2.0, 1.0
    %s780 = smul.f32 %s779, %s777
    %v781 = vstv %s780
    %782 = vst [vmem:[#allocation11] sm:$0xff] %v781
    // Predicated region
    $region22: #{tpu_custom_call.1} parent=1 // pred_check
      _
    $region23: #{tpu_custom_call.1} parent=1 // pred_check_branch
      %784 = sbr.rel (0) target = $region25
    $region24: #{tpu_custom_call.1} parent=1 // pred_region
      %s786 = ssub.s32 128, 128
      %787 = vsyncadd [#allocation8], %s786
      %s789 = sshll.u32 [#allocation11], 4
      %s790 = int_to_ptr.vmem [resolvable:$true] %s789
      %792 = dma.vmem_to_hbm [thread:$0]  %s790, 128, %s5, [#allocation8]
    $region25: #{tpu_custom_call.1} parent=1 // pred_fallthru
      _
    // Predicated region
    $region26: #{tpu_custom_call.1} parent=1 // pred_check
      _
    $region27: #{tpu_custom_call.1} parent=1 // pred_check_branch
      %794 = sbr.rel (0) target = $region29
    $region28: #{tpu_custom_call.1} parent=1 // pred_region
      %795 = dma.done [#allocation8], 128
    $region29: #{tpu_custom_call.1} parent=1 // pred_fallthru
      _
    %796 = vsyncpa [#allocation7], 1
    %797 = vsyncpa [#allocation10], 1
    %798 = vsyncpa [#allocation8], 1

</llo_original>
